<compile_context>
chip_gen: v5e
topology: v5e:2x2
jax: 0.10.0
libtpu: 0.0.40
codegen_flags: <defaults>
</compile_context>

<pallas_src>
import functools
import math

import jax
import jax.numpy as jnp
from jax.experimental import pallas as pl
from jax.experimental.pallas import tpu as pltpu


def _round_up(x, m):
    return (x + m - 1) // m * m


def _pick_c_tile(C, hw, itemsize, budget_bytes):
    """Largest channel tile whose double-buffered input block fits the budget."""
    per_channel = max(1, hw * itemsize)
    max_ct = max(1, budget_bytes // (2 * per_channel))
    if C <= max_ct:
        return C
    ct = (min(max_ct, C) // 8) * 8          # tiles < C must be multiples of 8
    while ct >= 8:
        if C % ct == 0:
            return ct
        ct -= 8
    # TODO(synk): no multiple-of-8 divisor of C fits the budget; fall back to full C.
    return C


# --------------------------- kernel 1: channel mean / max ---------------------------

def _reduce_kernel(x_ref, red_ref, sum_ref, max_ref, *, C, c_tile):
    # x_ref   : VMEM (c_tile, HW) native-dtype input block
    # red_ref : VMEM (2, HW) f32 output (row 0 = channel mean, row 1 = channel max)
    # sum/max : VMEM (8, HW) f32 running accumulators (sublane-dense)
    ct = pl.program_id(1)
    nc = pl.num_programs(1)

    @pl.when(ct == 0)
    def _init():
        sum_ref[...] = jnp.zeros_like(sum_ref)
        max_ref[...] = jnp.full(max_ref.shape, -jnp.inf, max_ref.dtype)

    # Single pass over channels: each 8-channel sublane group is loaded once and
    # feeds both the running sum and the running max.
    for c0 in range(0, c_tile, 8):
        r = min(8, c_tile - c0)
        xc = x_ref[c0:c0 + r, :].astype(jnp.float32)          # (r, HW)
        sum_ref[0:r, :] = sum_ref[0:r, :] + xc
        max_ref[0:r, :] = jnp.maximum(max_ref[0:r, :], xc)

    @pl.when(ct == nc - 1)
    def _finalize():
        red_ref[0, :] = jnp.sum(sum_ref[...], axis=0) * (1.0 / C)
        red_ref[1, :] = jnp.max(max_ref[...], axis=0)


# --------------------------- kernel 2: 2->1 conv + sigmoid --------------------------

def _conv_kernel(w_ref, f_ref, o_ref, *, K, H, L_pad):
    # w_ref : SMEM (2*K*K,) flat conv weights, index = c*K*K + ki*K + kj
    # f_ref : VMEM (2, Hp_pad, L_pad) halo-padded, lane-packed reduced maps (f32)
    # o_ref : VMEM (H, L_pad) lane-dense output tile
    accs = [jnp.zeros((H, L_pad), jnp.float32) for _ in range(4)]
    for c in range(2):
        plane = f_ref[c]                                      # one aligned plane load
        for ki in range(K):
            band = plane[ki:ki + H, :]                        # value slice (in-vreg)
            for kj in range(K):
                # shifted[l] = band[l + kj]; the per-element halo keeps packed
                # elements self-contained, wrapped lanes land only in discarded pad.
                shifted = band if kj == 0 else pltpu.roll(band, L_pad - kj, axis=1)
                a = 2 * c + (ki & 1)                          # 4 partials -> VALU ILP
                accs[a] = accs[a] + w_ref[c * K * K + ki * K + kj] * shifted
    acc = (accs[0] + accs[1]) + (accs[2] + accs[3])
    o_ref[...] = jax.nn.sigmoid(acc).astype(o_ref.dtype)


# ------------------------------------ wrapper ---------------------------------------

def spatial_attention(x, weight, *, kernel_size=7, c_tile=None, lane_target=512,
                      vmem_limit_bytes=32 * 1024 * 1024):
    """x: (N, C, H, W); weight: (1, 2, K, K), no bias -> (N, 1, H, W) in x.dtype."""
    assert kernel_size in (3, 7), "kernel size must be 3 or 7"
    K = kernel_size
    P = 3 if K == 7 else 1
    N, C, H, W = x.shape
    HW = H * W

    if c_tile is None:
        c_tile = _pick_c_tile(C, HW, x.dtype.itemsize, budget_bytes=8 << 20)
    assert C % c_tile == 0, "c_tile must divide C"
    num_c = C // c_tile

    # ---- pass 1: channel mean/max on the native layout + dtype (no input repack) ----
    x3 = x.reshape(N, C, HW)                                  # free contiguous reshape
    reduce_cost = pl.CostEstimate(
        flops=2 * N * C * HW,
        transcendentals=0,
        bytes_accessed=N * C * HW * x.dtype.itemsize + N * 2 * HW * 4)

    red = pl.pallas_call(
        functools.partial(_reduce_kernel, C=C, c_tile=c_tile),
        out_shape=jax.ShapeDtypeStruct((N, 2, HW), jnp.float32),
        grid_spec=pltpu.PrefetchScalarGridSpec(
            num_scalar_prefetch=0,
            grid=(N, num_c),
            in_specs=[pl.BlockSpec((None, c_tile, HW), lambda n, ct: (n, ct, 0))],
            out_specs=pl.BlockSpec((None, 2, HW), lambda n, ct: (n, 0, 0)),
            scratch_shapes=[pltpu.VMEM((8, HW), jnp.float32),
                            pltpu.VMEM((8, HW), jnp.float32)]),
        compiler_params=pltpu.CompilerParams(
            dimension_semantics=("parallel", "arbitrary"),
            vmem_limit_bytes=vmem_limit_bytes),
        cost_estimate=reduce_cost,
    )(x3)

    # ---- halo + lane packing of the tiny reduced maps only (a few KB) ----
    Wp = W + 2 * P
    Hp = H + 2 * P
    Hp_pad = _round_up(Hp, 8)
    # G elements per group; capped at ceil(N/2) so num_groups >= 2 (feeds both v7x
    # TensorCores), bounded by lane_target for large lane-dense blocks on v5e/v6e.
    G = max(1, min(lane_target // Wp, -(-N // 2)))
    num_groups = -(-N // G)
    N_pad = num_groups * G
    L = G * Wp
    L_pad = _round_up(L, 128)

    r4 = red.reshape(N, 2, H, W)
    r4 = jnp.pad(r4, ((0, N_pad - N), (0, 0), (P, Hp_pad - H - P), (P, P)))
    r4 = r4.reshape(num_groups, G, 2, Hp_pad, Wp).transpose(0, 2, 3, 1, 4)
    r4 = r4.reshape(num_groups, 2, Hp_pad, L)
    r4 = jnp.pad(r4, ((0, 0), (0, 0), (0, 0), (0, L_pad - L)))

    w_flat = weight.reshape(-1).astype(jnp.float32)           # (2*K*K,)

    conv_cost = pl.CostEstimate(
        flops=num_groups * 2 * 2 * K * K * H * L_pad,
        transcendentals=num_groups * H * L_pad,
        bytes_accessed=num_groups * (2 * Hp_pad * L_pad * 4
                                     + H * L_pad * x.dtype.itemsize))

    out_packed = pl.pallas_call(
        functools.partial(_conv_kernel, K=K, H=H, L_pad=L_pad),
        out_shape=jax.ShapeDtypeStruct((num_groups, H, L_pad), x.dtype),
        grid_spec=pltpu.PrefetchScalarGridSpec(
            num_scalar_prefetch=0,
            grid=(num_groups,),
            in_specs=[
                pl.BlockSpec(memory_space=pltpu.MemorySpace.SMEM),   # conv weights
                pl.BlockSpec((None, 2, Hp_pad, L_pad), lambda g: (g, 0, 0, 0)),
            ],
            out_specs=pl.BlockSpec((None, H, L_pad), lambda g: (g, 0, 0))),
        compiler_params=pltpu.CompilerParams(
            dimension_semantics=("parallel",),
            vmem_limit_bytes=vmem_limit_bytes),
        cost_estimate=conv_cost,
    )(w_flat, r4)

    # Unpack: lanes [j*Wp, j*Wp + W) of group g hold batch element n = g*G + j.
    y = out_packed[:, :, :L].reshape(num_groups, H, G, Wp)[:, :, :, :W]
    y = y.transpose(0, 2, 1, 3).reshape(N_pad, H, W)[:N]
    return y[:, None, :, :]


def _reference(x, weight, padding):
    avg = jnp.mean(x, axis=1, keepdims=True)
    mx = jnp.max(x, axis=1, keepdims=True)
    feat = jnp.concatenate([avg, mx], axis=1)
    y = jax.lax.conv_general_dilated(
        feat, weight, window_strides=(1, 1),
        padding=[(padding, padding), (padding, padding)],
        dimension_numbers=("NCHW", "OIHW", "NCHW"))
    return jax.nn.sigmoid(y)


if __name__ == "__main__":
    key = jax.random.PRNGKey(0)
    kx, kw = jax.random.split(key)

    N, C, H, W = 2, 4, 16, 16
    kernel_size = 7
    padding = 3

    x = jax.random.normal(kx, (N, C, H, W), dtype=jnp.float32)

    # Deterministic conv weight init (kaiming-uniform-like, matching Conv2d shapes).
    fan_in = 2 * kernel_size * kernel_size
    bound = 1.0 / math.sqrt(float(fan_in))
    weight = jax.random.uniform(
        kw, (1, 2, kernel_size, kernel_size),
        minval=-bound, maxval=bound, dtype=jnp.float32)

    out = spatial_attention(x, weight, kernel_size=kernel_size)
    out = jax.block_until_ready(out)

    ref = _reference(x, weight, padding)
    assert out.shape == (N, 1, H, W)
    assert jnp.allclose(out, ref, atol=1e-5, rtol=1e-5)

    print("KERNEL_OK")
</pallas_src>

<mosaic_0001>
module attributes {stable_mosaic.version = 11 : i64} {
  func.func @_reduce_kernel(%arg0: i32, %arg1: i32, %arg2: memref<1x4x256xf32, #tpu.memory_space<vmem>>, %arg3: memref<1x2x256xf32, #tpu.memory_space<vmem>>, %arg4: memref<8x256xf32, #tpu.memory_space<vmem>>, %arg5: memref<8x256xf32, #tpu.memory_space<vmem>>) attributes {dimension_semantics = [#tpu.dimension_semantics<parallel>, #tpu.dimension_semantics<arbitrary>], iteration_bounds = array<i64: 2, 1>, scalar_prefetch = 0 : i64, scratch_operands = 2 : i64, tpu.core_type = #tpu.core_type<tc>, window_params = [{transform_indices = @transform_0, window_bounds = array<i64: 1, 4, 256>}, {transform_indices = @transform_1, window_bounds = array<i64: 1, 2, 256>}]} {
    %c0_i32 = arith.constant 0 : i32
    %0 = arith.cmpi eq, %arg1, %c0_i32 : i32
    %1 = arith.extui %0 : i1 to i32
    %c0_i32_0 = arith.constant 0 : i32
    %2 = arith.cmpi ne, %1, %c0_i32_0 : i32
    scf.if %2 {
      %cst = arith.constant 0.000000e+00 : f32
      %14 = vector.broadcast %cst : f32 to vector<8x256xf32>
      %c0_13 = arith.constant 0 : index
      %c0_14 = arith.constant 0 : index
      %15 = vector.load %arg4[%c0_13, %c0_14] : memref<8x256xf32, #tpu.memory_space<vmem>>, vector<8x256xf32>
      tpu.vector_store %arg4[%c0_13, %c0_14], %14 {strides = array<i32>} : memref<8x256xf32, #tpu.memory_space<vmem>>, vector<8x256xf32>,
      %cst_15 = arith.constant 0xFF800000 : f32
      %16 = vector.broadcast %cst_15 : f32 to vector<8x256xf32>
      %c0_16 = arith.constant 0 : index
      %c0_17 = arith.constant 0 : index
      %17 = vector.load %arg5[%c0_16, %c0_17] : memref<8x256xf32, #tpu.memory_space<vmem>>, vector<8x256xf32>
      tpu.vector_store %arg5[%c0_16, %c0_17], %16 {strides = array<i32>} : memref<8x256xf32, #tpu.memory_space<vmem>>, vector<8x256xf32>,
    } else {
    }
    %c0 = arith.constant 0 : index
    %c0_1 = arith.constant 0 : index
    %c0_2 = arith.constant 0 : index
    %3 = vector.load %arg2[%c0, %c0_1, %c0_2] : memref<1x4x256xf32, #tpu.memory_space<vmem>>, vector<1x4x256xf32>
    %4 = vector.shape_cast %3 : vector<1x4x256xf32> to vector<4x256xf32>
    %c0_3 = arith.constant 0 : index
    %c0_4 = arith.constant 0 : index
    %5 = vector.load %arg4[%c0_3, %c0_4] : memref<8x256xf32, #tpu.memory_space<vmem>>, vector<4x256xf32>
    %6 = arith.addf %5, %4 : vector<4x256xf32>
    %c0_5 = arith.constant 0 : index
    %c0_6 = arith.constant 0 : index
    %7 = vector.load %arg4[%c0_5, %c0_6] : memref<8x256xf32, #tpu.memory_space<vmem>>, vector<4x256xf32>
    tpu.vector_store %arg4[%c0_5, %c0_6], %6 {strides = array<i32>} : memref<8x256xf32, #tpu.memory_space<vmem>>, vector<4x256xf32>,
    %c0_7 = arith.constant 0 : index
    %c0_8 = arith.constant 0 : index
    %8 = vector.load %arg5[%c0_7, %c0_8] : memref<8x256xf32, #tpu.memory_space<vmem>>, vector<4x256xf32>
    %9 = arith.maximumf %8, %4 : vector<4x256xf32>
    %c0_9 = arith.constant 0 : index
    %c0_10 = arith.constant 0 : index
    %10 = vector.load %arg5[%c0_9, %c0_10] : memref<8x256xf32, #tpu.memory_space<vmem>>, vector<4x256xf32>
    tpu.vector_store %arg5[%c0_9, %c0_10], %9 {strides = array<i32>} : memref<8x256xf32, #tpu.memory_space<vmem>>, vector<4x256xf32>,
    %c0_i32_11 = arith.constant 0 : i32
    %11 = arith.cmpi eq, %arg1, %c0_i32_11 : i32
    %12 = arith.extui %11 : i1 to i32
    %c0_i32_12 = arith.constant 0 : i32
    %13 = arith.cmpi ne, %12, %c0_i32_12 : i32
    scf.if %13 {
      %c0_13 = arith.constant 0 : index
      %c0_14 = arith.constant 0 : index
      %14 = vector.load %arg4[%c0_13, %c0_14] : memref<8x256xf32, #tpu.memory_space<vmem>>, vector<8x256xf32>
      %cst = arith.constant dense<0.000000e+00> : vector<256xf32>
      %15 = vector.multi_reduction <add>, %14, %cst [0] : vector<8x256xf32> to vector<256xf32>
      %cst_15 = arith.constant 2.500000e-01 : f32
      %16 = vector.broadcast %cst_15 : f32 to vector<256xf32>
      %17 = arith.mulf %15, %16 : vector<256xf32>
      %c0_16 = arith.constant 0 : index
      %c0_17 = arith.constant 0 : index
      %c0_18 = arith.constant 0 : index
      %18 = vector.load %arg3[%c0_16, %c0_17, %c0_18] : memref<1x2x256xf32, #tpu.memory_space<vmem>>, vector<1x1x256xf32>
      %19 = vector.shape_cast %18 : vector<1x1x256xf32> to vector<256xf32>
      %20 = vector.shape_cast %17 : vector<256xf32> to vector<1x1x256xf32>
      tpu.vector_store %arg3[%c0_16, %c0_17, %c0_18], %20 {strides = array<i32>} : memref<1x2x256xf32, #tpu.memory_space<vmem>>, vector<1x1x256xf32>,
      %c0_19 = arith.constant 0 : index
      %c0_20 = arith.constant 0 : index
      %21 = vector.load %arg5[%c0_19, %c0_20] : memref<8x256xf32, #tpu.memory_space<vmem>>, vector<8x256xf32>
      %cst_21 = arith.constant dense<0xFF800000> : vector<256xf32>
      %22 = vector.multi_reduction <maximumf>, %21, %cst_21 [0] : vector<8x256xf32> to vector<256xf32>
      %c0_22 = arith.constant 0 : index
      %c1 = arith.constant 1 : index
      %c0_23 = arith.constant 0 : index
      %23 = vector.load %arg3[%c0_22, %c1, %c0_23] : memref<1x2x256xf32, #tpu.memory_space<vmem>>, vector<1x1x256xf32>
      %24 = vector.shape_cast %23 : vector<1x1x256xf32> to vector<256xf32>
      %25 = vector.shape_cast %22 : vector<256xf32> to vector<1x1x256xf32>
      tpu.vector_store %arg3[%c0_22, %c1, %c0_23], %25 {strides = array<i32>} : memref<1x2x256xf32, #tpu.memory_space<vmem>>, vector<1x1x256xf32>,
    } else {
    }
    return
  }
  func.func @transform_0(%arg0: i32, %arg1: i32) -> (i32, i32, i32) {
    %c0_i32 = arith.constant 0 : i32
    %c0_i32_0 = arith.constant 0 : i32
    return %arg0, %arg1, %c0_i32 : i32, i32, i32
  }
  func.func @transform_1(%arg0: i32, %arg1: i32) -> (i32, i32, i32) {
    %c0_i32 = arith.constant 0 : i32
    %c0_i32_0 = arith.constant 0 : i32
    %c0_i32_1 = arith.constant 0 : i32
    return %arg0, %c0_i32, %c0_i32_0 : i32, i32, i32
  }
}

</mosaic_0001>

<llo_original>
// kernel: tpu_custom_call.1
$region0: #{tpu_custom_call.1}
  #allocation0 [shape = 'u32[]', space=smem, size = 0x4, offset = 0x4, fixed_abs, tag = 'smem constant byte address 0x4 - core index']
  #allocation1 [shape = 'u32[72,128]{1,0:T(1,128)}', space=vmem, size = 0x9000, scoped, tag = 'internal scratch']
  #allocation2 [shape = 'f32[8,256]{1,0:T(8,128)}', space=vmem, size = 0x2000, scoped, tag = 'scratch operand']
  #allocation3 [shape = 'f32[8,256]{1,0:T(8,128)}', space=vmem, size = 0x2000, scoped, tag = 'scratch operand']
  %s0 = inlined_call_operand.hbm [shape: f32[2,4,256], index: 0, kind: input, shape index: {}]
  %s1 = inlined_call_operand.hbm [shape: f32[2,2,256], index: 1, kind: output, shape index: {}]
  %s2 = sld [smem:[#allocation0]]
  $region49: #{tpu_custom_call.1} parent=0
    _
  %s4 = ssub.s32 1, %s2
  %s5 = scalar_select 0, %s4, %s2
  $region1: #{tpu_custom_call.1} parent=0
    #allocation4 [shape = 'u8[8192]{0}', space=vmem, size = 0x2000, scoped, tag = 'input window, operand 0']
    #allocation5 [shape = 's32[2]{0}', space=sflag, size = 0x8, scoped, tag = 'scoped memory for tpu_custom_call.1']
    #allocation6 [shape = 's32[2]{0}', space=sflag, size = 0x8, scoped, tag = 'scoped memory for tpu_custom_call.1']
    #allocation7 [shape = 'u8[4096]{0}', space=vmem, size = 0x1000, scoped, tag = 'output window, operand 0']
    %6 = vsyncpa [#allocation5], 0
    %s7 = scalar_lea.sflag [#allocation5], 1
    %8 = vsyncpa %s7, 0
    %9 = vsyncpa [#allocation6], 0
    %s10 = scalar_lea.sflag [#allocation6], 1
    %11 = vsyncpa %s10, 0
    loop: start=0, step=1, limit=4
    $region2: #{tpu_custom_call.1} parent=1 // loop_pre_header
      _
    $region3: #{tpu_custom_call.1} parent=1 // loop_header
      %s13 = sphi 0, %s17
      %p14 = scmp.ge.s32.totalorder %s13, 4
      %s20 = sphi 0, %s32
      %s21 = sphi 0, %s28
      %s22 = sphi 0, %s20
      %s23 = sphi 0, %s21
      %s24 = sphi 0, %s22
      %s25 = sphi 0, %s23
      %s37 = sphi 0, %s39
      %s40 = sphi 0, %s37
      %s41 = sphi 0, %s40
      %s57 = sphi 0, %s41
      %s63 = sphi 0, %s65
      %s66 = sphi 0, %s63
      %s67 = sphi 0, %s66
      %s83 = sphi 0, %s67
    $region4: #{tpu_custom_call.1} parent=1 // loop_header_branch
      %16 = sbr.rel (%p14) target = $region8
    $region5: #{tpu_custom_call.1} parent=1 // loop_body
      %s18 = ssub.s32 %s13, 1
      %s19 = ssub.s32 %s13, 2
      %s26 = sadd.s32 1, %s21
      %p27 = scmp.ge.s32.totalorder %s26, 1
      %s28 = scalar_select %p27, 0, %s26
      %s29 = sadd.s32 1, %s20
      %s30 = scalar_select %p27, %s29, %s20
      %p31 = scmp.ge.s32.totalorder %s30, 2
      %s32 = scalar_select %p31, 0, %s30
      %s33 = ssub.s32 %s20, %s32
      %s34 = ssub.s32 %s21, %s28
      %s35 = sor.u32 %s33, %s34
      %p36 = scmp.eq.s32.totalorder %s35, 0
      %s38 = sadd.s32 %s37, 1
      %s39 = scalar_select %p36, %s37, %s38
      %p42 = pneg %p36
      %p43 = scmp.eq.s32.totalorder %s13, 1
      %p44 = por %p42, %p43
      %p45 = scmp.ne.s32.totalorder %s37, %s40
      %p46 = scmp.eq.s32.totalorder %s13, 0
      %p47 = por %p45, %p46
      %p48 = scmp.ne.s32.totalorder %s37, %s40
      %p49 = scmp.eq.s32.totalorder %s18, 1
      %p50 = por %p48, %p49
      %p51 = scmp.ne.s32.totalorder %s40, %s41
      %p52 = scmp.eq.s32.totalorder %s18, 0
      %p53 = por %p51, %p52
      %p54 = scmp.ne.s32.totalorder %s40, %s41
      %p55 = scmp.eq.s32.totalorder %s19, 1
      %p56 = por %p54, %p55
      %p58 = scmp.ne.s32.totalorder %s41, %s57
      %p59 = scmp.eq.s32.totalorder %s19, 0
      %p60 = por %p58, %p59
      %s61 = ssub.s32 %s20, %s32
      %p62 = scmp.eq.s32.totalorder %s61, 0
      %s64 = sadd.s32 %s63, 1
      %s65 = scalar_select %p62, %s63, %s64
      %p68 = pneg %p62
      %p69 = scmp.eq.s32.totalorder %s13, 1
      %p70 = por %p68, %p69
      %p71 = scmp.ne.s32.totalorder %s63, %s66
      %p72 = scmp.eq.s32.totalorder %s13, 0
      %p73 = por %p71, %p72
      %p74 = scmp.ne.s32.totalorder %s63, %s66
      %p75 = scmp.eq.s32.totalorder %s18, 1
      %p76 = por %p74, %p75
      %p77 = scmp.ne.s32.totalorder %s66, %s67
      %p78 = scmp.eq.s32.totalorder %s18, 0
      %p79 = por %p77, %p78
      %p80 = scmp.ne.s32.totalorder %s66, %s67
      %p81 = scmp.eq.s32.totalorder %s19, 1
      %p82 = por %p80, %p81
      %p84 = scmp.ne.s32.totalorder %s67, %s83
      %p85 = scmp.eq.s32.totalorder %s19, 0
      %p86 = por %p84, %p85
      %p87 = scmp.le.s32.totalorder 1, %s13
      %p88 = scmp.lt.s32.totalorder %s13, 3
      %p89 = pnand %p87, %p88
      %p90 = pneg %p89
      // Predicated region
      $region9: #{tpu_custom_call.1} parent=5 // pred_check
        _
      $region10: #{tpu_custom_call.1} parent=5 // pred_check_branch
        %92 = sbr.rel (%p89) target = $region12
      $region11: #{tpu_custom_call.1} parent=5 // pred_region
        %s93 = ssub.s32 %s13, 1
      $region12: #{tpu_custom_call.1} parent=5 // pred_fallthru
        _
      %p94 = scmp.lt.s32.totalorder %s13, 2
      // Predicated region
      $region13: #{tpu_custom_call.1} parent=5 // pred_check
        %p95 = pneg %p94
      $region14: #{tpu_custom_call.1} parent=5 // pred_check_branch
        %97 = sbr.rel (%p95) target = $region16
      $region15: #{tpu_custom_call.1} parent=5 // pred_region
        // Predicated region
        $region17: #{tpu_custom_call.1} parent=15 // pred_check
          %p98 = pneg %p47
        $region18: #{tpu_custom_call.1} parent=15 // pred_check_branch
          %100 = sbr.rel (%p98) target = $region20
        $region19: #{tpu_custom_call.1} parent=15 // pred_region
          %s101 = sand.u32 %s37, 1
          %s102 = scalar_lea.sflag [#allocation5], %s101
          %s103 = sand.u32 %s37, 1
          %s104 = smul.addr %s103, 8
          %s105 = scalar_lea.vmem [#allocation4], %s104
          %107 = vsyncadd %s102, 0
          %s108 = smul.addr %s21, 2
          %s109 = smul.addr %s20, 2
          %s110 = sadd.s32 %s108, %s109
          %s111 = smul.addr %s110, 4
          %s112 = scalar_lea.hbm %s0, %s111
          %s114 = sshll.u32 %s112, 4
          %s115 = int_to_ptr.hbm [resolvable:$true] %s114
          %s116 = sshll.u32 %s105, 4
          %s117 = int_to_ptr.vmem [resolvable:$true] %s116
          %119 = dma.hbm_to_vmem [thread:$0]  %s115, 128, %s117, %s102
        $region20: #{tpu_custom_call.1} parent=15 // pred_fallthru
          _
      $region16: #{tpu_custom_call.1} parent=5 // pred_fallthru
        _
      %p120 = scmp.le.s32.totalorder 1, %s13
      %p121 = scmp.lt.s32.totalorder %s13, 3
      %p122 = pnand %p120, %p121
      %p123 = pneg %p122
      // Predicated region
      $region21: #{tpu_custom_call.1} parent=5 // pred_check
        _
      $region22: #{tpu_custom_call.1} parent=5 // pred_check_branch
        %125 = sbr.rel (%p122) target = $region24
      $region23: #{tpu_custom_call.1} parent=5 // pred_region
        %s126 = ssub.s32 %s13, 1
        %s127 = sand.u32 %s40, 1
        %s128 = scalar_lea.sflag [#allocation5], %s127
        %s129 = sand.u32 %s40, 1
        %s130 = smul.addr %s129, 8
        %s131 = scalar_lea.vmem [#allocation4], %s130
        // Predicated region
        $region25: #{tpu_custom_call.1} parent=23 // pred_check
          %p132 = pneg %p53
        $region26: #{tpu_custom_call.1} parent=23 // pred_check_branch
          %134 = sbr.rel (%p132) target = $region28
        $region27: #{tpu_custom_call.1} parent=23 // pred_region
          %136 = dma.done %s128, 128
        $region28: #{tpu_custom_call.1} parent=23 // pred_fallthru
          _
        %s137 = sand.u32 %s40, 1
        %s138 = scalar_lea.sflag [#allocation5], %s137
        %s139 = sand.u32 %s40, 1
        %s140 = smul.addr %s139, 8
        %s141 = scalar_lea.vmem [#allocation4], %s140
        %p142 = pneg %p53
        %p143 = pneg %p50
        %p144 = pneg %p79
        %p145 = pneg %p76
        %s146 = sand.u32 %s66, 1
        %s147 = scalar_lea.sflag [#allocation6], %s146
        %s148 = sand.u32 %s66, 1
        %s149 = smul.addr %s148, 4
        %s150 = scalar_lea.vmem [#allocation7], %s149
        %p151 = scmp.eq.s32.totalorder %s23, 0
        // Predicated region
        $region29: #{tpu_custom_call.1} parent=23 // pred_check
          %p152 = pneg %p151
        $region30: #{tpu_custom_call.1} parent=23 // pred_check_branch
          %154 = sbr.rel (%p152) target = $region32
        $region31: #{tpu_custom_call.1} parent=23 // pred_region
          %155 = vst [vmem:[#allocation2] sm:$0xff] 0.0
          %156 = vst [vmem:[#allocation2 + $0x8] sm:$0xff] 0.0
          %157 = vst [vmem:[#allocation3] sm:$0xff] -inf
          %158 = vst [vmem:[#allocation3 + $0x8] sm:$0xff] -inf
        $region32: #{tpu_custom_call.1} parent=23 // pred_fallthru
          _
        %v159 = vld [vmem:[%s131] sm:$0xff]
        %v160 = vld [vmem:[#allocation2] sm:$0xf]
        %v161 = vld [vmem:[#allocation2 + $0x8] sm:$0xf]
        %163 = vst [vmem:[#allocation1] ss:$2 sm:$0xff] %v159
        %v164 = vld.sshfl [vmem:[#allocation1] sm:$0xff pattern:$0x75316420]
        %v165 = vld.sshfl [vmem:[#allocation1 + $0x8] sm:$0xff pattern:$0x75316420]
        %v168 = vadd.f32 %v160, %v164
        %v169 = vadd.f32 %v161, %v165
        %170 = vst [vmem:[#allocation2] sm:$0xf] %v168
        %171 = vst [vmem:[#allocation2 + $0x8] sm:$0xf] %v169
        %v172 = vld [vmem:[#allocation3] sm:$0xf]
        %v173 = vld [vmem:[#allocation3 + $0x8] sm:$0xf]
        %174 = vst [vmem:[#allocation1] ss:$2 sm:$0xff] %v159
        %v175 = vld.sshfl [vmem:[#allocation1] sm:$0xff pattern:$0x75316420]
        %v176 = vld.sshfl [vmem:[#allocation1 + $0x8] sm:$0xff pattern:$0x75316420]
        %v179 = vmax.f32 %v172, %v175
        %v180 = vmax.f32 %v173, %v176
        %181 = vst [vmem:[#allocation3] sm:$0xf] %v179
        %182 = vst [vmem:[#allocation3 + $0x8] sm:$0xf] %v180
        // Predicated region
        $region33: #{tpu_custom_call.1} parent=23 // pred_check
          %p183 = pneg %p151
        $region34: #{tpu_custom_call.1} parent=23 // pred_check_branch
          %185 = sbr.rel (%p183) target = $region36
        $region35: #{tpu_custom_call.1} parent=23 // pred_region
          %v186 = vld [vmem:[#allocation2] sm:$0xff]
          %v187 = vld [vmem:[#allocation2 + $0x8] sm:$0xff]
          %v188 = vrot.slane %v186, 4
          %v189 = vadd.f32 %v186, %v188
          %v190 = vrot.slane %v189, 2
          %v191 = vadd.f32 %v189, %v190
          %v192 = vrot.slane %v191, 1
          %v193 = vadd.f32 %v191, %v192
          %v194 = vrot.slane %v187, 4
          %v195 = vadd.f32 %v187, %v194
          %v196 = vrot.slane %v195, 2
          %v197 = vadd.f32 %v195, %v196
          %v198 = vrot.slane %v197, 1
          %v199 = vadd.f32 %v197, %v198
          %v200 = vmul.f32 %v193, 0.25
          %v201 = vmul.f32 %v199, 0.25
          %v204 = vrot.slane %v201, 7
          %vm205 = vcmask 1040384
          %v206 = vsel %vm205, %v200, %v204
          %v208 = vlaneseq
          %vm209 = vcmp.ge.s32.totalorder %v208, 0
          %vm210 = vcmp.lt.s32.totalorder %v208, 256
          %vm211 = vmand %vm209, %vm210
          %212 = vst.msk [vmem:[%s150] ss:$2 sm:$0x3] %vm211, %v206
          %v213 = vld [vmem:[#allocation3] sm:$0xff]
          %v214 = vld [vmem:[#allocation3 + $0x8] sm:$0xff]
          %v215 = vrot.slane %v213, 4
          %v216 = vmax.f32 %v213, %v215
          %v217 = vrot.slane %v216, 2
          %v218 = vmax.f32 %v216, %v217
          %v219 = vrot.slane %v218, 1
          %v220 = vmax.f32 %v218, %v219
          %v221 = vrot.slane %v214, 4
          %v222 = vmax.f32 %v214, %v221
          %v223 = vrot.slane %v222, 2
          %v224 = vmax.f32 %v222, %v223
          %v225 = vrot.slane %v224, 1
          %v226 = vmax.f32 %v224, %v225
          %v229 = vrot.slane %v226, 7
          %v230 = vsel %vm205, %v220, %v229
          %s232 = scalar_lea.vmem %s150, 1 [#allocation7]
          %233 = vst.msk [vmem:[%s232] ss:$2 sm:$0x3] %vm211, %v230
        $region36: #{tpu_custom_call.1} parent=23 // pred_fallthru
          _
        %s234 = sand.u32 %s66, 1
        %s235 = scalar_lea.sflag [#allocation6], %s234
        %s236 = sand.u32 %s66, 1
        %s237 = smul.addr %s236, 4
        %s238 = scalar_lea.vmem [#allocation7], %s237
        // Predicated region
        $region37: #{tpu_custom_call.1} parent=23 // pred_check
          %p239 = pneg %p76
        $region38: #{tpu_custom_call.1} parent=23 // pred_check_branch
          %241 = sbr.rel (%p239) target = $region40
        $region39: #{tpu_custom_call.1} parent=23 // pred_region
          %243 = vsyncadd %s235, 0
          %s244 = smul.addr %s22, 2
          %s245 = smul.addr %s244, 2
          %s246 = scalar_lea.hbm %s1, %s245
          %s248 = sshll.u32 %s238, 4
          %s249 = int_to_ptr.vmem [resolvable:$true] %s248
          %s250 = sshll.u32 %s246, 4
          %s251 = int_to_ptr.hbm [resolvable:$true] %s250
          %253 = dma.vmem_to_hbm [thread:$0]  %s249, 64, %s251, %s235
        $region40: #{tpu_custom_call.1} parent=23 // pred_fallthru
          _
      $region24: #{tpu_custom_call.1} parent=5 // pred_fallthru
        _
      %p254 = scmp.le.s32.totalorder 2, %s13
      // Predicated region
      $region41: #{tpu_custom_call.1} parent=5 // pred_check
        %p255 = pneg %p254
      $region42: #{tpu_custom_call.1} parent=5 // pred_check_branch
        %257 = sbr.rel (%p255) target = $region44
      $region43: #{tpu_custom_call.1} parent=5 // pred_region
        %s258 = ssub.s32 %s13, 2
        // Predicated region
        $region45: #{tpu_custom_call.1} parent=43 // pred_check
          %p259 = pneg %p82
        $region46: #{tpu_custom_call.1} parent=43 // pred_check_branch
          %261 = sbr.rel (%p259) target = $region48
        $region47: #{tpu_custom_call.1} parent=43 // pred_region
          %s262 = sand.u32 %s67, 1
          %s263 = scalar_lea.sflag [#allocation6], %s262
          %s264 = sand.u32 %s67, 1
          %s265 = smul.addr %s264, 4
          %s266 = scalar_lea.vmem [#allocation7], %s265
          %268 = dma.done %s263, 64
        $region48: #{tpu_custom_call.1} parent=43 // pred_fallthru
          _
      $region44: #{tpu_custom_call.1} parent=5 // pred_fallthru
        _
    $region6: #{tpu_custom_call.1} parent=1 // loop_footer
      %s17 = sadd.s32 1, %s13
    $region7: #{tpu_custom_call.1} parent=1 // loop_footer_branch
      %12 = sbr.rel target = $region3
    $region8: #{tpu_custom_call.1} parent=1 // loop_exit
      _
    %269 = vsyncpa [#allocation5], 1
    %s270 = scalar_lea.sflag [#allocation5], 1
    %271 = vsyncpa %s270, 1
    %272 = vsyncpa [#allocation6], 1
    %s273 = scalar_lea.sflag [#allocation6], 1
    %274 = vsyncpa %s273, 1

</llo_original>
